<compile_context>
chip_gen: v7x
topology: tpu7x:2x2x1
jax: 0.10.0
libtpu: 0.0.40
codegen_flags: <defaults>
</compile_context>

<pallas_src>
import functools

import jax
import jax.numpy as jnp
from jax import lax
from jax.experimental import pallas as pl
from jax.experimental.pallas import tpu as pltpu


def _round_up(x: int, m: int) -> int:
    return ((x + m - 1) // m) * m


def _linear_kernel(x_ref, w_ref, b_ref, o_ref, acc_ref, *, nk, k_rem):
    """One (tm, tn) output tile, accumulated over the K grid axis."""
    k = pl.program_id(2)

    x = x_ref[...]
    w = w_ref[...]
    if k_rem:  # static: K does not divide tk -> mask the overhang of the last chunk
        tk_blk = x.shape[1]
        valid = jnp.where(k == nk - 1, k_rem, tk_blk)
        col = lax.broadcasted_iota(jnp.int32, x.shape, 1)
        x = jnp.where(col < valid, x, jnp.zeros_like(x))
        row = lax.broadcasted_iota(jnp.int32, w.shape, 0)
        w = jnp.where(row < valid, w, jnp.zeros_like(w))

    partial = jnp.dot(x, w, preferred_element_type=jnp.float32)

    if nk == 1:
        # Single K chunk: skip the accumulator round-trip entirely.
        o_ref[...] = (partial + b_ref[...].astype(jnp.float32)).astype(o_ref.dtype)
    else:
        @pl.when(k == 0)
        def _first():
            acc_ref[...] = partial          # direct write, no zero-init + add

        @pl.when(k > 0)
        def _accum():
            acc_ref[...] += partial

        @pl.when(k == nk - 1)
        def _epilogue():
            out = acc_ref[...] + b_ref[...].astype(jnp.float32)
            o_ref[...] = out.astype(o_ref.dtype)


@functools.partial(jax.jit, static_argnames=("tm", "tn", "tk", "compute_dtype"))
def my_layer_forward(x, weight, bias=None, *, tm=512, tn=1024, tk=512,
                     compute_dtype=jnp.bfloat16):
    """y = x @ weight + bias as a Pallas TPU kernel.

    compute_dtype=jnp.bfloat16 (default) feeds the MXU bf16 operands with an
    f32 accumulator (faster, ~bf16-level operand rounding); use jnp.float32 for
    exact parity with the torch float32 reference.
    """
    orig_shape = x.shape
    K = orig_shape[-1]
    x2 = x.reshape(-1, K)
    M = x2.shape[0]
    Kw, N = weight.shape
    assert K == Kw, f"inner dims mismatch: {K} vs {Kw}"
    out_dtype = x.dtype

    if bias is None:
        bias = jnp.zeros((N,), dtype=jnp.float32)
    b2d = bias.astype(jnp.float32).reshape(1, N)

    cdt = jnp.dtype(compute_dtype)
    x_c = x2.astype(cdt)
    w_c = weight.astype(cdt)

    # Clamp tiles to the (alignment-rounded) problem size; no M/N padding of the
    # arrays themselves — partial edge blocks handle the overhang.
    sub = 16 if cdt.itemsize < 4 else 8          # bf16 packs 16 rows / sublane group
    tm = min(tm, _round_up(M, sub))
    tn = min(tn, _round_up(N, 128))
    if K <= tk:
        tk = K          # block spans the full K dim -> no tail, no masking
        k_rem = 0
    else:
        k_rem = K % tk  # tail (if any) masked in-kernel; zero-copy launch
    nk = pl.cdiv(K, tk)

    grid = (pl.cdiv(M, tm), pl.cdiv(N, tn), nk)

    # Advisory cost: weight is streamed grid_m times, x streamed grid_n times.
    x_bytes = grid[1] * M * K * cdt.itemsize
    w_bytes = grid[0] * K * N * cdt.itemsize
    o_bytes = M * N * jnp.dtype(out_dtype).itemsize
    cost = pl.CostEstimate(
        flops=2 * M * N * K,
        transcendentals=0,
        bytes_accessed=x_bytes + w_bytes + o_bytes + N * 4,
    )

    kernel = functools.partial(_linear_kernel, nk=nk, k_rem=k_rem)

    out = pl.pallas_call(
        kernel,
        out_shape=jax.ShapeDtypeStruct((M, N), out_dtype),
        grid_spec=pltpu.PrefetchScalarGridSpec(
            num_scalar_prefetch=0,
            grid=grid,
            in_specs=[
                pl.BlockSpec((tm, tk), lambda i, j, k: (i, k)),   # x tile
                pl.BlockSpec((tk, tn), lambda i, j, k: (k, j)),   # weight tile
                pl.BlockSpec((1, tn), lambda i, j, k: (0, j)),    # bias tile
            ],
            out_specs=pl.BlockSpec((tm, tn), lambda i, j, k: (i, j)),
            scratch_shapes=[pltpu.VMEM((tm, tn), jnp.float32)],
        ),
        compiler_params=pltpu.CompilerParams(
            dimension_semantics=("parallel", "parallel", "arbitrary"),
            vmem_limit_bytes=48 * 1024 * 1024,  # fits all gens; headroom on v7x (64 MiB)
        ),
        cost_estimate=cost,
    )(x_c, w_c, b2d)

    return out.reshape(orig_shape[:-1] + (N,))


if __name__ == "__main__":
    # Shapes consistent with MyLayer(in_features=32, out_features=128).
    batch, in_features, out_features = 8, 32, 128

    key = jax.random.PRNGKey(0)
    kx, kw, kb = jax.random.split(key, 3)

    # MyLayer.__init__ uses zeros; use deterministic random synthetic params so
    # the kernel computes something non-trivial.
    x = jax.random.normal(kx, (batch, in_features), dtype=jnp.float32)
    weight = jax.random.normal(kw, (in_features, out_features), dtype=jnp.float32) * 0.05
    bias = jax.random.normal(kb, (out_features,), dtype=jnp.float32) * 0.05

    def ref_linear(xx, ww, bb, cdt):
        y = jnp.dot(xx.astype(cdt), ww.astype(cdt), preferred_element_type=jnp.float32)
        return (y + bb.astype(jnp.float32)).astype(xx.dtype)

    # 1) Default bf16-operand / f32-accumulate path (precision-matched reference).
    y = jax.block_until_ready(my_layer_forward(x, weight, bias))
    assert y.shape == (batch, out_features)
    assert jnp.allclose(y, ref_linear(x, weight, bias, jnp.bfloat16), atol=2e-2, rtol=2e-2)

    # 2) Exact-f32 path (matches the torch float32 module semantics).
    y32 = jax.block_until_ready(
        my_layer_forward(x, weight, bias, compute_dtype=jnp.float32))
    assert jnp.allclose(y32, x @ weight + bias, atol=2e-2, rtol=2e-2)

    # 3) Non-divisible M/N (partial edge blocks, no wrapper-side padding).
    x2 = jax.random.normal(kx, (300, 200), dtype=jnp.float32)
    w2 = jax.random.normal(kw, (200, 700), dtype=jnp.float32) * 0.05
    b2 = jax.random.normal(kb, (700,), dtype=jnp.float32) * 0.05
    y2 = jax.block_until_ready(my_layer_forward(x2, w2, b2))
    assert jnp.allclose(y2, ref_linear(x2, w2, b2, jnp.bfloat16), atol=2e-2, rtol=2e-2)

    # 4) K > tk with a non-divisible tail (exercises the in-kernel K masking path).
    x3 = jax.random.normal(kx, (64, 1100), dtype=jnp.float32)
    w3 = jax.random.normal(kw, (1100, 256), dtype=jnp.float32) * 0.05
    b3 = jax.random.normal(kb, (256,), dtype=jnp.float32) * 0.05
    y3 = jax.block_until_ready(my_layer_forward(x3, w3, b3))
    assert jnp.allclose(y3, ref_linear(x3, w3, b3, jnp.bfloat16), atol=2e-2, rtol=2e-2)

    print("KERNEL_OK")
</pallas_src>

<mosaic_0001>
module attributes {stable_mosaic.version = 11 : i64} {
  func.func @_linear_kernel(%arg0: i32, %arg1: i32, %arg2: i32, %arg3: memref<16x32xbf16, #tpu.memory_space<vmem>>, %arg4: memref<32x128xbf16, #tpu.memory_space<vmem>>, %arg5: memref<1x128xf32, #tpu.memory_space<vmem>>, %arg6: memref<16x128xf32, #tpu.memory_space<vmem>>, %arg7: memref<16x128xf32, #tpu.memory_space<vmem>>) attributes {dimension_semantics = [#tpu.dimension_semantics<parallel>, #tpu.dimension_semantics<parallel>, #tpu.dimension_semantics<arbitrary>], iteration_bounds = array<i64: 1, 1, 1>, scalar_prefetch = 0 : i64, scratch_operands = 1 : i64, tpu.core_type = #tpu.core_type<tc>, window_params = [{transform_indices = @transform_0, window_bounds = array<i64: 16, 32>}, {transform_indices = @transform_1, window_bounds = array<i64: 32, 128>}, {transform_indices = @transform_2, window_bounds = array<i64: 1, 128>}, {transform_indices = @transform_3, window_bounds = array<i64: 16, 128>}]} {
    %c0 = arith.constant 0 : index
    %c0_0 = arith.constant 0 : index
    %0 = vector.load %arg3[%c0, %c0_0] : memref<16x32xbf16, #tpu.memory_space<vmem>>, vector<16x32xbf16>
    %c0_1 = arith.constant 0 : index
    %c0_2 = arith.constant 0 : index
    %1 = vector.load %arg4[%c0_1, %c0_2] : memref<32x128xbf16, #tpu.memory_space<vmem>>, vector<32x128xbf16>
    %cst = arith.constant dense<0.000000e+00> : vector<16x128xf32>
    %2 = tpu.matmul %0, %1, %cst {dimension_numbers = #tpu.dot_dimension_numbers<[1], [0], [0], [1], [0, 0, 1, 1], [], []>} : vector<16x32xbf16>, vector<32x128xbf16>, vector<16x128xf32> -> vector<16x128xf32>
    %c0_3 = arith.constant 0 : index
    %c0_4 = arith.constant 0 : index
    %3 = vector.load %arg5[%c0_3, %c0_4] : memref<1x128xf32, #tpu.memory_space<vmem>>, vector<1x128xf32>
    %4 = vector.broadcast %3 : vector<1x128xf32> to vector<16x128xf32>
    %5 = arith.addf %2, %4 : vector<16x128xf32>
    %c0_5 = arith.constant 0 : index
    %c0_6 = arith.constant 0 : index
    %6 = vector.load %arg6[%c0_5, %c0_6] : memref<16x128xf32, #tpu.memory_space<vmem>>, vector<16x128xf32>
    tpu.vector_store %arg6[%c0_5, %c0_6], %5 {strides = array<i32>} : memref<16x128xf32, #tpu.memory_space<vmem>>, vector<16x128xf32>,
    return
  }
  func.func @transform_0(%arg0: i32, %arg1: i32, %arg2: i32) -> (i32, i32) {
    %c0_i32 = arith.constant 0 : i32
    return %arg0, %arg2 : i32, i32
  }
  func.func @transform_1(%arg0: i32, %arg1: i32, %arg2: i32) -> (i32, i32) {
    %c0_i32 = arith.constant 0 : i32
    return %arg2, %arg1 : i32, i32
  }
  func.func @transform_2(%arg0: i32, %arg1: i32, %arg2: i32) -> (i32, i32) {
    %c0_i32 = arith.constant 0 : i32
    %c0_i32_0 = arith.constant 0 : i32
    return %c0_i32, %arg1 : i32, i32
  }
  func.func @transform_3(%arg0: i32, %arg1: i32, %arg2: i32) -> (i32, i32) {
    %c0_i32 = arith.constant 0 : i32
    return %arg0, %arg1 : i32, i32
  }
}

</mosaic_0001>

<llo_original>
// kernel: my_layer_forward.1
$region0: #{my_layer_forward.1}
  #allocation0 [shape = 'u32[]', space=smem, size = 0x4, offset = 0x4, fixed_abs, tag = 'smem constant byte address 0x4 - core index']
  #allocation1 [shape = 'u32[144,128]{1,0:T(1,128)}', space=vmem, size = 0x12000, scoped, tag = 'internal scratch']
  #allocation2 [shape = 'f32[16,128]{1,0:T(8,128)}', space=vmem, size = 0x2000, scoped, tag = 'scratch operand']
  %s0 = inlined_call_operand.vmem [shape: bf16[8,32], index: 0, kind: input, shape index: {}]
  %s1 = inlined_call_operand.vmem [shape: bf16[32,128], index: 1, kind: input, shape index: {}]
  %s2 = inlined_call_operand.vmem [shape: f32[1,128], index: 2, kind: input, shape index: {}]
  %s3 = inlined_call_operand.hbm [shape: f32[8,128], index: 3, kind: output, shape index: {}]
  %s4 = sld [smem:[#allocation0]]
  $region22: #{my_layer_forward.1} parent=0
    _
  %s6 = ssub.s32 1, %s4
  %s7 = scalar_select 0, %s6, %s4
  $region1: #{my_layer_forward.1} parent=0
    #allocation3 [shape = 'u8[8192]{0}', space=vmem, size = 0x2000, scoped, tag = 'output window, operand 0, single buffered']
    #allocation4 [shape = 's32[1]{0}', space=sflag, size = 0x4, scoped, tag = 'scoped memory for my_layer_forward.1']
    %8 = vsyncpa [#allocation4], 0
    // Predicated region
    $region2: #{my_layer_forward.1} parent=1 // pred_check
      _
    $region3: #{my_layer_forward.1} parent=1 // pred_check_branch
      %10 = sbr.rel (0) target = $region5
    $region4: #{my_layer_forward.1} parent=1 // pred_region
      _
    $region5: #{my_layer_forward.1} parent=1 // pred_fallthru
      _
    // Predicated region
    $region6: #{my_layer_forward.1} parent=1 // pred_check
      _
    $region7: #{my_layer_forward.1} parent=1 // pred_check_branch
      %12 = sbr.rel (0) target = $region9
    $region8: #{my_layer_forward.1} parent=1 // pred_region
      _
    $region9: #{my_layer_forward.1} parent=1 // pred_fallthru
      _
    // Predicated region
    $region10: #{my_layer_forward.1} parent=1 // pred_check
      _
    $region11: #{my_layer_forward.1} parent=1 // pred_check_branch
      %14 = sbr.rel (0) target = $region13
    $region12: #{my_layer_forward.1} parent=1 // pred_region
      _
    $region13: #{my_layer_forward.1} parent=1 // pred_fallthru
      _
    %v16 = vld [vmem:[%s0] sm:$0xf]
    %v17 = vld [vmem:[%s0 + $0x4] sm:$0xf]
    %v18 = vld [vmem:[%s1] sm:$0xf]
    %v19 = vld [vmem:[%s1 + $0x4] sm:$0xf]
    %v20 = vld [vmem:[%s1 + $0x8] sm:$0xf]
    %v21 = vld [vmem:[%s1 + $0xc] sm:$0xf]
    %v22 = vld [vmem:[%s2] sm:$0x1]
    %v24 = vlaneseq
    %v25 = vshrl.u32 %v24, 7
    %v26 = vsub.s32 0, %v25
    %v27 = vrot.slane %v22, %v26
    %v31 = vunpack.c.l.b16 %v16
    %v32 = vunpack.c.l.b16 %v17
    %v33 = vpack.c.b16 %v32, %v31
    %v38 = vunpack.c.l.b16 %v18
    %v39 = vunpack.c.l.b16 %v19
    %v40 = vunpack.c.l.b16 %v20
    %v41 = vunpack.c.l.b16 %v21
    %v42 = vpack.c.b16 %v39, %v38
    %v43 = vpack.c.b16 %v41, %v40
    %vm46 = vcmask 261120
    %v48 = vsel %vm46, %v33, 0
    %50 = vmatprep.subr.bf16.mxu0 0
    %51 = vmatpush1.bf16.msra.mxu0 %v42
    %52 = vmatprep.subr.bf16.mxu0 0
    %53 = vmatpush1.bf16.msra.mxu0 %v43
    %54 = vmatprep.subr.bf16.mxu0 0
    %55 = vmatpush1.bf16.msra.mxu0 0
    %56 = vmatprep.subr.bf16.mxu0 0
    %57 = vmatpush1.bf16.msra.mxu0 0
    %58 = vmatprep.subr.bf16.mxu0 0
    %59 = vmatpush1.bf16.msra.mxu0 0
    %60 = vmatprep.subr.bf16.mxu0 0
    %61 = vmatpush1.bf16.msra.mxu0 0
    %62 = vmatprep.subr.bf16.mxu0 0
    %63 = vmatpush1.bf16.msra.mxu0 0
    %64 = vmatprep.subr.bf16.mxu0 0
    %65 = vmatpush1.bf16.msra.mxu0 0
    %66 = vmatprep.subr.bf16.mxu0 0
    %67 = vmatpush1.bf16.msra.mxu0 0
    %68 = vmatprep.subr.bf16.mxu0 0
    %69 = vmatpush1.bf16.msra.mxu0 0
    %70 = vmatprep.subr.bf16.mxu0 0
    %71 = vmatpush1.bf16.msra.mxu0 0
    %72 = vmatprep.subr.bf16.mxu0 0
    %73 = vmatpush1.bf16.msra.mxu0 0
    %74 = vmatprep.subr.bf16.mxu0 0
    %75 = vmatpush1.bf16.msra.mxu0 0
    %76 = vmatprep.subr.bf16.mxu0 0
    %77 = vmatpush1.bf16.msra.mxu0 0
    %78 = vmatprep.subr.bf16.mxu0 0
    %79 = vmatpush1.bf16.msra.mxu0 0
    %80 = vmatprep.subr.bf16.mxu0 0
    %81 = vmatpush1.bf16.msra.mxu0 0
    %82 = vmatprep.mubr.bf16.mxu0 0
    %83 = vmatmul.mubr.bf16.gmra.mrb[0].mxu0 %v48
    %v84 = vpop.f32.mrb[0].mxu0
    %v85 = vadd.f32 %v27, %v84
    %v86 = vpop.f32.mrb[0].mxu0
    %v87 = vpop.f32.mrb[0].mxu0
    %v88 = vadd.f32 %v27, %v87
    %v89 = vpop.f32.mrb[0].mxu0
    %90 = vdwg.mxu0
    %91 = vst [vmem:[#allocation3] sm:$0xff] %v85
    %92 = vst [vmem:[#allocation3 + $0x8] sm:$0xff] %v88
    // Predicated region
    $region14: #{my_layer_forward.1} parent=1 // pred_check
      _
    $region15: #{my_layer_forward.1} parent=1 // pred_check_branch
      %94 = sbr.rel (0) target = $region17
    $region16: #{my_layer_forward.1} parent=1 // pred_region
      %s96 = ssub.s32 256, 128
      %97 = vsyncadd [#allocation4], %s96
      %s98 = sshll.u32 [#allocation3], 4
      %s99 = int_to_ptr.vmem [resolvable:$true] %s98
      %104 = dma.vmem_to_hbm [thread:$0]  %s99, 128, %s3, [#allocation4], 128, 128, 8
    $region17: #{my_layer_forward.1} parent=1 // pred_fallthru
      _
    // Predicated region
    $region18: #{my_layer_forward.1} parent=1 // pred_check
      _
    $region19: #{my_layer_forward.1} parent=1 // pred_check_branch
      %106 = sbr.rel (0) target = $region21
    $region20: #{my_layer_forward.1} parent=1 // pred_region
      %107 = dma.done [#allocation4], 256
    $region21: #{my_layer_forward.1} parent=1 // pred_fallthru
      _
    %108 = vsyncpa [#allocation4], 1

</llo_original>
